<compile_context>
chip_gen: v7x
topology: tpu7x:2x2x1
jax: 0.10.0
libtpu: 0.0.40
codegen_flags: <defaults>
</compile_context>

<pallas_src>
import functools

import numpy as np
import jax
import jax.numpy as jnp
from jax import lax
from jax.experimental import pallas as pl
from jax.experimental.pallas import tpu as pltpu

K = 3  # conv kernel size (static)


def _resblock_kernel(m_ref, x_ref, w1_ref, b1_ref, w2_ref, b2_ref, a_ref, o_ref, *, W):
    """Fused ResidualBlock for one batch element, fully channel-major.

    m_ref : (4, H*W) int32   edge masks over the flattened spatial axis:
                             rows = [w==0, w==W-1, h==0, h==H-1]
    x_ref : (1, C, H*W)      flattened-NCHW input tile (lane-dense); also residual
    w1_ref, w2_ref : (C, K*K*C)  im2col conv weights, column order (kh, kw, ci)
    b1_ref, b2_ref : (C, 1)      biases
    a_ref : (1,)             PReLU slope, in SMEM
    o_ref : (1, C, H*W)
    """
    C = x_ref.shape[1]
    HW = x_ref.shape[2]

    x = x_ref[0].astype(jnp.float32)                     # (C, HW), lane-dense

    # Edge masks, hoisted and broadcast once (reused by both convs).
    m = m_ref[...]
    m_w0 = jnp.broadcast_to(m[0:1, :] != 0, (C, HW))     # w == 0
    m_wL = jnp.broadcast_to(m[1:2, :] != 0, (C, HW))     # w == W-1
    m_h0 = jnp.broadcast_to(m[2:3, :] != 0, (C, HW))     # h == 0
    m_hL = jnp.broadcast_to(m[3:4, :] != 0, (C, HW))     # h == H-1

    def shifted_windows(t):
        """9 reflection-padded 3x3 taps of t (C, HW), in (kh, kw) order.

        Window (kh, kw): value at (h, w) is t[refl(h+kh-1), refl(w+kw-1)] with
        mirror-without-edge reflection (nn.ReflectionPad2d(1) semantics).
        Built with static rolls over the flattened HW axis + boundary selects.
        """
        # horizontal (w) shift with reflection
        left = jnp.roll(t, 1, axis=1)                    # [p] = t[p-1]
        right = jnp.roll(t, -1, axis=1)                  # [p] = t[p+1]
        a_m1 = jnp.where(m_w0, right, left)              # refl(w-1)
        a_p1 = jnp.where(m_wL, left, right)              # refl(w+1)

        cols = []
        for a in (a_m1, t, a_p1):                        # dw = -1, 0, +1 (kw)
            up = jnp.roll(a, W, axis=1)                  # [p] = a[p-W]  (row h-1)
            down = jnp.roll(a, -W, axis=1)               # [p] = a[p+W]  (row h+1)
            b_m1 = jnp.where(m_h0, down, up)             # refl(h-1)
            b_p1 = jnp.where(m_hL, up, down)             # refl(h+1)
            cols.append((b_m1, a, b_p1))                 # indexed by kh
        # reorder to kh-major, kw-minor to match the weight column layout
        return [cols[kw][kh] for kh in range(K) for kw in range(K)]

    def conv3x3(t, w_ref, b_ref):                        # -> (C, HW)
        patches = jnp.concatenate(shifted_windows(t), axis=0)     # (9C, HW)
        y = jnp.dot(w_ref[...].astype(jnp.float32), patches,
                    preferred_element_type=jnp.float32)           # (C, HW)
        return y + b_ref[...].astype(jnp.float32)

    alpha = a_ref[0]

    h1 = conv3x3(x, w1_ref, b1_ref)
    h1 = jnp.where(h1 > 0, h1, alpha * h1)               # PReLU, single shared slope
    h2 = conv3x3(h1, w2_ref, b2_ref)

    o_ref[0] = (h2 * jnp.float32(0.1) + x).astype(o_ref.dtype)


def residual_block(x_nchw, w1_oihw, b1, w2_oihw, b2, prelu_alpha):
    """ResidualBlock forward.  x_nchw: (N, C, H, W) float32 -> (N, C, H, W)."""
    N, C, H, W = x_nchw.shape
    HW = H * W

    # Contiguous reshape only — no NCHW<->NHWC transpose passes over HBM.
    x = x_nchw.reshape(N, C, HW).astype(jnp.float32)

    # OIHW -> (o, kh, kw, ci) -> (C, K*K*C), matching the im2col row order.
    w1 = jnp.transpose(w1_oihw, (0, 2, 3, 1)).reshape(C, K * K * C).astype(jnp.float32)
    w2 = jnp.transpose(w2_oihw, (0, 2, 3, 1)).reshape(C, K * K * C).astype(jnp.float32)
    b1c = b1.reshape(C, 1).astype(jnp.float32)
    b2c = b2.reshape(C, 1).astype(jnp.float32)
    alpha = jnp.reshape(prelu_alpha, (1,)).astype(jnp.float32)

    # Edge masks over the flattened spatial axis (trace-time constants).
    p = np.arange(HW)
    masks = jnp.asarray(
        np.stack([p % W == 0, p % W == W - 1, p < W, p >= HW - W]).astype(np.int32))

    kernel = functools.partial(_resblock_kernel, W=W)

    # TODO(synk): for large dehazing resolutions, add a spatial (H) grid axis with
    # a 2-row halo (reflection applied only at true image borders) and size the
    # tile per generation's VMEM (halve on v7x's 64 MiB).
    out_flat = pl.pallas_call(
        kernel,
        out_shape=jax.ShapeDtypeStruct((N, C, HW), jnp.float32),
        grid=(N,),
        in_specs=[
            pl.BlockSpec((4, HW), lambda n: (0, 0)),                 # edge masks
            pl.BlockSpec((1, C, HW), lambda n: (n, 0, 0)),           # x / residual
            pl.BlockSpec((C, K * K * C), lambda n: (0, 0)),          # w1
            pl.BlockSpec((C, 1), lambda n: (0, 0)),                  # b1
            pl.BlockSpec((C, K * K * C), lambda n: (0, 0)),          # w2
            pl.BlockSpec((C, 1), lambda n: (0, 0)),                  # b2
            pl.BlockSpec(memory_space=pltpu.MemorySpace.SMEM),       # PReLU slope
        ],
        out_specs=pl.BlockSpec((1, C, HW), lambda n: (n, 0, 0)),
        compiler_params=pltpu.CompilerParams(
            dimension_semantics=("parallel",),
            vmem_limit_bytes=32 * 1024 * 1024,
        ),
    )(masks, x, w1, b1c, w2, b2c, alpha)

    return out_flat.reshape(N, C, H, W)


def _reference(x_nchw, w1, b1, w2, b2, alpha):
    """Pure-JAX reference mirroring the PyTorch module (for validation)."""
    x = jnp.transpose(x_nchw, (0, 2, 3, 1))

    def conv(inp, w_oihw, b):
        xp = jnp.pad(inp, ((0, 0), (1, 1), (1, 1), (0, 0)), mode="reflect")
        w_hwio = jnp.transpose(w_oihw, (2, 3, 1, 0))
        y = lax.conv_general_dilated(
            xp, w_hwio, window_strides=(1, 1), padding="VALID",
            dimension_numbers=("NHWC", "HWIO", "NHWC"))
        return y + b.reshape(1, 1, 1, -1)

    h = conv(x, w1, b1)
    h = jnp.where(h > 0, h, alpha * h)
    out = conv(h, w2, b2) * 0.1 + x
    return jnp.transpose(out, (0, 3, 1, 2))


if __name__ == "__main__":
    N, C, H, W = 2, 4, 16, 16

    key = jax.random.PRNGKey(0)
    kx, kw1, kb1, kw2, kb2 = jax.random.split(key, 5)

    x = jax.random.normal(kx, (N, C, H, W), dtype=jnp.float32)
    # Conv2d weight shape (out_ch, in_ch, kH, kW); deterministic small init.
    w1 = jax.random.normal(kw1, (C, C, K, K), dtype=jnp.float32) * 0.1
    b1 = jax.random.normal(kb1, (C,), dtype=jnp.float32) * 0.1
    w2 = jax.random.normal(kw2, (C, C, K, K), dtype=jnp.float32) * 0.1
    b2 = jax.random.normal(kb2, (C,), dtype=jnp.float32) * 0.1
    prelu_alpha = jnp.float32(0.25)  # nn.PReLU() default init

    out = jax.jit(residual_block)(x, w1, b1, w2, b2, prelu_alpha)
    out = jax.block_until_ready(out)

    ref = _reference(x, w1, b1, w2, b2, prelu_alpha)
    assert out.shape == (N, C, H, W)
    assert jnp.allclose(out, ref, atol=1e-3, rtol=1e-3), "mismatch vs reference"

    print("KERNEL_OK")
</pallas_src>

<mosaic_0001>
module attributes {stable_mosaic.version = 11 : i64} {
  func.func @_resblock_kernel(%arg0: i32, %arg1: memref<4x256xi32, #tpu.memory_space<vmem>>, %arg2: memref<1x4x256xf32, #tpu.memory_space<vmem>>, %arg3: memref<4x36xf32, #tpu.memory_space<vmem>>, %arg4: memref<4x1xf32, #tpu.memory_space<vmem>>, %arg5: memref<4x36xf32, #tpu.memory_space<vmem>>, %arg6: memref<4x1xf32, #tpu.memory_space<vmem>>, %arg7: memref<1xf32, #tpu.memory_space<smem>>, %arg8: memref<1x4x256xf32, #tpu.memory_space<vmem>>) attributes {dimension_semantics = [#tpu.dimension_semantics<parallel>], iteration_bounds = array<i64: 2>, scalar_prefetch = 0 : i64, scratch_operands = 0 : i64, tpu.core_type = #tpu.core_type<tc>, window_params = [{pipeline_mode = #tpu.pipeline_mode<synchronous>, transform_indices = @transform_0, window_bounds = array<i64: 4, 256>}, {transform_indices = @transform_1, window_bounds = array<i64: 1, 4, 256>}, {pipeline_mode = #tpu.pipeline_mode<synchronous>, transform_indices = @transform_2, window_bounds = array<i64: 4, 36>}, {pipeline_mode = #tpu.pipeline_mode<synchronous>, transform_indices = @transform_3, window_bounds = array<i64: 4, 1>}, {pipeline_mode = #tpu.pipeline_mode<synchronous>, transform_indices = @transform_4, window_bounds = array<i64: 4, 36>}, {pipeline_mode = #tpu.pipeline_mode<synchronous>, transform_indices = @transform_5, window_bounds = array<i64: 4, 1>}, {transform_indices = @transform_6, window_bounds = array<i64: 1>}, {transform_indices = @transform_7, window_bounds = array<i64: 1, 4, 256>}]} {
    %c0 = arith.constant 0 : index
    %c0_0 = arith.constant 0 : index
    %c0_1 = arith.constant 0 : index
    %0 = vector.load %arg2[%c0, %c0_0, %c0_1] : memref<1x4x256xf32, #tpu.memory_space<vmem>>, vector<1x4x256xf32>
    %1 = vector.shape_cast %0 : vector<1x4x256xf32> to vector<4x256xf32>
    %c0_2 = arith.constant 0 : index
    %c0_3 = arith.constant 0 : index
    %2 = vector.load %arg1[%c0_2, %c0_3] : memref<4x256xi32, #tpu.memory_space<vmem>>, vector<4x256xi32>
    %3 = vector.extract_strided_slice %2 {offsets = [0, 0], sizes = [1, 256], strides = [1, 1]} : vector<4x256xi32> to vector<1x256xi32>
    %c0_i32 = arith.constant 0 : i32
    %4 = vector.broadcast %c0_i32 : i32 to vector<1x256xi32>
    %5 = arith.cmpi ne, %3, %4 : vector<1x256xi32>
    %6 = vector.shape_cast %5 : vector<1x256xi1> to vector<1x256xi1>
    %7 = vector.broadcast %6 : vector<1x256xi1> to vector<4x256xi1>
    %8 = vector.extract_strided_slice %2 {offsets = [1, 0], sizes = [1, 256], strides = [1, 1]} : vector<4x256xi32> to vector<1x256xi32>
    %c0_i32_4 = arith.constant 0 : i32
    %9 = vector.broadcast %c0_i32_4 : i32 to vector<1x256xi32>
    %10 = arith.cmpi ne, %8, %9 : vector<1x256xi32>
    %11 = vector.shape_cast %10 : vector<1x256xi1> to vector<1x256xi1>
    %12 = vector.broadcast %11 : vector<1x256xi1> to vector<4x256xi1>
    %13 = vector.extract_strided_slice %2 {offsets = [2, 0], sizes = [1, 256], strides = [1, 1]} : vector<4x256xi32> to vector<1x256xi32>
    %c0_i32_5 = arith.constant 0 : i32
    %14 = vector.broadcast %c0_i32_5 : i32 to vector<1x256xi32>
    %15 = arith.cmpi ne, %13, %14 : vector<1x256xi32>
    %16 = vector.shape_cast %15 : vector<1x256xi1> to vector<1x256xi1>
    %17 = vector.broadcast %16 : vector<1x256xi1> to vector<4x256xi1>
    %18 = vector.extract_strided_slice %2 {offsets = [3, 0], sizes = [1, 256], strides = [1, 1]} : vector<4x256xi32> to vector<1x256xi32>
    %c0_i32_6 = arith.constant 0 : i32
    %19 = vector.broadcast %c0_i32_6 : i32 to vector<1x256xi32>
    %20 = arith.cmpi ne, %18, %19 : vector<1x256xi32>
    %21 = vector.shape_cast %20 : vector<1x256xi1> to vector<1x256xi1>
    %22 = vector.broadcast %21 : vector<1x256xi1> to vector<4x256xi1>
    %c0_7 = arith.constant 0 : index
    %23 = memref.load %arg7[%c0_7] : memref<1xf32, #tpu.memory_space<smem>>
    %24 = vector.extract_strided_slice %1 {offsets = [0, 255], sizes = [4, 1], strides = [1, 1]} : vector<4x256xf32> to vector<4x1xf32>
    %25 = vector.extract_strided_slice %1 {offsets = [0, 0], sizes = [4, 255], strides = [1, 1]} : vector<4x256xf32> to vector<4x255xf32>
    %26 = tpu.concatenate %24, %25 in 1 : vector<4x1xf32>, vector<4x255xf32> -> vector<4x256xf32>
    %27 = vector.extract_strided_slice %1 {offsets = [0, 1], sizes = [4, 255], strides = [1, 1]} : vector<4x256xf32> to vector<4x255xf32>
    %28 = vector.extract_strided_slice %1 {offsets = [0, 0], sizes = [4, 1], strides = [1, 1]} : vector<4x256xf32> to vector<4x1xf32>
    %29 = tpu.concatenate %27, %28 in 1 : vector<4x255xf32>, vector<4x1xf32> -> vector<4x256xf32>
    %30 = arith.select %7, %29, %26 : vector<4x256xi1>, vector<4x256xf32>
    %31 = arith.select %12, %26, %29 : vector<4x256xi1>, vector<4x256xf32>
    %32 = vector.extract_strided_slice %30 {offsets = [0, 240], sizes = [4, 16], strides = [1, 1]} : vector<4x256xf32> to vector<4x16xf32>
    %33 = vector.extract_strided_slice %30 {offsets = [0, 0], sizes = [4, 240], strides = [1, 1]} : vector<4x256xf32> to vector<4x240xf32>
    %34 = tpu.concatenate %32, %33 in 1 : vector<4x16xf32>, vector<4x240xf32> -> vector<4x256xf32>
    %35 = vector.extract_strided_slice %30 {offsets = [0, 16], sizes = [4, 240], strides = [1, 1]} : vector<4x256xf32> to vector<4x240xf32>
    %36 = vector.extract_strided_slice %30 {offsets = [0, 0], sizes = [4, 16], strides = [1, 1]} : vector<4x256xf32> to vector<4x16xf32>
    %37 = tpu.concatenate %35, %36 in 1 : vector<4x240xf32>, vector<4x16xf32> -> vector<4x256xf32>
    %38 = arith.select %17, %37, %34 : vector<4x256xi1>, vector<4x256xf32>
    %39 = arith.select %22, %34, %37 : vector<4x256xi1>, vector<4x256xf32>
    %40 = vector.extract_strided_slice %1 {offsets = [0, 240], sizes = [4, 16], strides = [1, 1]} : vector<4x256xf32> to vector<4x16xf32>
    %41 = vector.extract_strided_slice %1 {offsets = [0, 0], sizes = [4, 240], strides = [1, 1]} : vector<4x256xf32> to vector<4x240xf32>
    %42 = tpu.concatenate %40, %41 in 1 : vector<4x16xf32>, vector<4x240xf32> -> vector<4x256xf32>
    %43 = vector.extract_strided_slice %1 {offsets = [0, 16], sizes = [4, 240], strides = [1, 1]} : vector<4x256xf32> to vector<4x240xf32>
    %44 = vector.extract_strided_slice %1 {offsets = [0, 0], sizes = [4, 16], strides = [1, 1]} : vector<4x256xf32> to vector<4x16xf32>
    %45 = tpu.concatenate %43, %44 in 1 : vector<4x240xf32>, vector<4x16xf32> -> vector<4x256xf32>
    %46 = arith.select %17, %45, %42 : vector<4x256xi1>, vector<4x256xf32>
    %47 = arith.select %22, %42, %45 : vector<4x256xi1>, vector<4x256xf32>
    %48 = vector.extract_strided_slice %31 {offsets = [0, 240], sizes = [4, 16], strides = [1, 1]} : vector<4x256xf32> to vector<4x16xf32>
    %49 = vector.extract_strided_slice %31 {offsets = [0, 0], sizes = [4, 240], strides = [1, 1]} : vector<4x256xf32> to vector<4x240xf32>
    %50 = tpu.concatenate %48, %49 in 1 : vector<4x16xf32>, vector<4x240xf32> -> vector<4x256xf32>
    %51 = vector.extract_strided_slice %31 {offsets = [0, 16], sizes = [4, 240], strides = [1, 1]} : vector<4x256xf32> to vector<4x240xf32>
    %52 = vector.extract_strided_slice %31 {offsets = [0, 0], sizes = [4, 16], strides = [1, 1]} : vector<4x256xf32> to vector<4x16xf32>
    %53 = tpu.concatenate %51, %52 in 1 : vector<4x240xf32>, vector<4x16xf32> -> vector<4x256xf32>
    %54 = arith.select %17, %53, %50 : vector<4x256xi1>, vector<4x256xf32>
    %55 = arith.select %22, %50, %53 : vector<4x256xi1>, vector<4x256xf32>
    %56 = tpu.concatenate %38, %46, %54, %30, %1, %31, %39, %47, %55 in 0 : vector<4x256xf32>, vector<4x256xf32>, vector<4x256xf32>, vector<4x256xf32>, vector<4x256xf32>, vector<4x256xf32>, vector<4x256xf32>, vector<4x256xf32>, vector<4x256xf32> -> vector<36x256xf32>
    %c0_8 = arith.constant 0 : index
    %c0_9 = arith.constant 0 : index
    %57 = vector.load %arg3[%c0_8, %c0_9] : memref<4x36xf32, #tpu.memory_space<vmem>>, vector<4x36xf32>
    %cst = arith.constant dense<0.000000e+00> : vector<4x256xf32>
    %58 = tpu.matmul %57, %56, %cst {dimension_numbers = #tpu.dot_dimension_numbers<[1], [0], [0], [1], [0, 0, 1, 1], [], []>} : vector<4x36xf32>, vector<36x256xf32>, vector<4x256xf32> -> vector<4x256xf32>
    %c0_10 = arith.constant 0 : index
    %c0_11 = arith.constant 0 : index
    %59 = vector.load %arg4[%c0_10, %c0_11] : memref<4x1xf32, #tpu.memory_space<vmem>>, vector<4x1xf32>
    %60 = vector.broadcast %59 : vector<4x1xf32> to vector<4x256xf32>
    %61 = arith.addf %58, %60 : vector<4x256xf32>
    %cst_12 = arith.constant 0.000000e+00 : f32
    %62 = vector.broadcast %cst_12 : f32 to vector<4x256xf32>
    %63 = arith.cmpf ogt, %61, %62 : vector<4x256xf32>
    %64 = vector.broadcast %23 : f32 to vector<4x256xf32>
    %65 = arith.mulf %64, %61 : vector<4x256xf32>
    %66 = arith.select %63, %61, %65 : vector<4x256xi1>, vector<4x256xf32>
    %67 = vector.extract_strided_slice %66 {offsets = [0, 255], sizes = [4, 1], strides = [1, 1]} : vector<4x256xf32> to vector<4x1xf32>
    %68 = vector.extract_strided_slice %66 {offsets = [0, 0], sizes = [4, 255], strides = [1, 1]} : vector<4x256xf32> to vector<4x255xf32>
    %69 = tpu.concatenate %67, %68 in 1 : vector<4x1xf32>, vector<4x255xf32> -> vector<4x256xf32>
    %70 = vector.extract_strided_slice %66 {offsets = [0, 1], sizes = [4, 255], strides = [1, 1]} : vector<4x256xf32> to vector<4x255xf32>
    %71 = vector.extract_strided_slice %66 {offsets = [0, 0], sizes = [4, 1], strides = [1, 1]} : vector<4x256xf32> to vector<4x1xf32>
    %72 = tpu.concatenate %70, %71 in 1 : vector<4x255xf32>, vector<4x1xf32> -> vector<4x256xf32>
    %73 = arith.select %7, %72, %69 : vector<4x256xi1>, vector<4x256xf32>
    %74 = arith.select %12, %69, %72 : vector<4x256xi1>, vector<4x256xf32>
    %75 = vector.extract_strided_slice %73 {offsets = [0, 240], sizes = [4, 16], strides = [1, 1]} : vector<4x256xf32> to vector<4x16xf32>
    %76 = vector.extract_strided_slice %73 {offsets = [0, 0], sizes = [4, 240], strides = [1, 1]} : vector<4x256xf32> to vector<4x240xf32>
    %77 = tpu.concatenate %75, %76 in 1 : vector<4x16xf32>, vector<4x240xf32> -> vector<4x256xf32>
    %78 = vector.extract_strided_slice %73 {offsets = [0, 16], sizes = [4, 240], strides = [1, 1]} : vector<4x256xf32> to vector<4x240xf32>
    %79 = vector.extract_strided_slice %73 {offsets = [0, 0], sizes = [4, 16], strides = [1, 1]} : vector<4x256xf32> to vector<4x16xf32>
    %80 = tpu.concatenate %78, %79 in 1 : vector<4x240xf32>, vector<4x16xf32> -> vector<4x256xf32>
    %81 = arith.select %17, %80, %77 : vector<4x256xi1>, vector<4x256xf32>
    %82 = arith.select %22, %77, %80 : vector<4x256xi1>, vector<4x256xf32>
    %83 = vector.extract_strided_slice %66 {offsets = [0, 240], sizes = [4, 16], strides = [1, 1]} : vector<4x256xf32> to vector<4x16xf32>
    %84 = vector.extract_strided_slice %66 {offsets = [0, 0], sizes = [4, 240], strides = [1, 1]} : vector<4x256xf32> to vector<4x240xf32>
    %85 = tpu.concatenate %83, %84 in 1 : vector<4x16xf32>, vector<4x240xf32> -> vector<4x256xf32>
    %86 = vector.extract_strided_slice %66 {offsets = [0, 16], sizes = [4, 240], strides = [1, 1]} : vector<4x256xf32> to vector<4x240xf32>
    %87 = vector.extract_strided_slice %66 {offsets = [0, 0], sizes = [4, 16], strides = [1, 1]} : vector<4x256xf32> to vector<4x16xf32>
    %88 = tpu.concatenate %86, %87 in 1 : vector<4x240xf32>, vector<4x16xf32> -> vector<4x256xf32>
    %89 = arith.select %17, %88, %85 : vector<4x256xi1>, vector<4x256xf32>
    %90 = arith.select %22, %85, %88 : vector<4x256xi1>, vector<4x256xf32>
    %91 = vector.extract_strided_slice %74 {offsets = [0, 240], sizes = [4, 16], strides = [1, 1]} : vector<4x256xf32> to vector<4x16xf32>
    %92 = vector.extract_strided_slice %74 {offsets = [0, 0], sizes = [4, 240], strides = [1, 1]} : vector<4x256xf32> to vector<4x240xf32>
    %93 = tpu.concatenate %91, %92 in 1 : vector<4x16xf32>, vector<4x240xf32> -> vector<4x256xf32>
    %94 = vector.extract_strided_slice %74 {offsets = [0, 16], sizes = [4, 240], strides = [1, 1]} : vector<4x256xf32> to vector<4x240xf32>
    %95 = vector.extract_strided_slice %74 {offsets = [0, 0], sizes = [4, 16], strides = [1, 1]} : vector<4x256xf32> to vector<4x16xf32>
    %96 = tpu.concatenate %94, %95 in 1 : vector<4x240xf32>, vector<4x16xf32> -> vector<4x256xf32>
    %97 = arith.select %17, %96, %93 : vector<4x256xi1>, vector<4x256xf32>
    %98 = arith.select %22, %93, %96 : vector<4x256xi1>, vector<4x256xf32>
    %99 = tpu.concatenate %81, %89, %97, %73, %66, %74, %82, %90, %98 in 0 : vector<4x256xf32>, vector<4x256xf32>, vector<4x256xf32>, vector<4x256xf32>, vector<4x256xf32>, vector<4x256xf32>, vector<4x256xf32>, vector<4x256xf32>, vector<4x256xf32> -> vector<36x256xf32>
    %c0_13 = arith.constant 0 : index
    %c0_14 = arith.constant 0 : index
    %100 = vector.load %arg5[%c0_13, %c0_14] : memref<4x36xf32, #tpu.memory_space<vmem>>, vector<4x36xf32>
    %cst_15 = arith.constant dense<0.000000e+00> : vector<4x256xf32>
    %101 = tpu.matmul %100, %99, %cst_15 {dimension_numbers = #tpu.dot_dimension_numbers<[1], [0], [0], [1], [0, 0, 1, 1], [], []>} : vector<4x36xf32>, vector<36x256xf32>, vector<4x256xf32> -> vector<4x256xf32>
    %c0_16 = arith.constant 0 : index
    %c0_17 = arith.constant 0 : index
    %102 = vector.load %arg6[%c0_16, %c0_17] : memref<4x1xf32, #tpu.memory_space<vmem>>, vector<4x1xf32>
    %103 = vector.broadcast %102 : vector<4x1xf32> to vector<4x256xf32>
    %104 = arith.addf %101, %103 : vector<4x256xf32>
    %cst_18 = arith.constant 1.000000e-01 : f32
    %105 = vector.broadcast %cst_18 : f32 to vector<4x256xf32>
    %106 = arith.mulf %104, %105 : vector<4x256xf32>
    %107 = arith.addf %106, %1 : vector<4x256xf32>
    %c0_19 = arith.constant 0 : index
    %c0_20 = arith.constant 0 : index
    %c0_21 = arith.constant 0 : index
    %108 = vector.load %arg8[%c0_19, %c0_20, %c0_21] : memref<1x4x256xf32, #tpu.memory_space<vmem>>, vector<1x4x256xf32>
    %109 = vector.shape_cast %108 : vector<1x4x256xf32> to vector<4x256xf32>
    %110 = vector.shape_cast %107 : vector<4x256xf32> to vector<1x4x256xf32>
    tpu.vector_store %arg8[%c0_19, %c0_20, %c0_21], %110 {strides = array<i32>} : memref<1x4x256xf32, #tpu.memory_space<vmem>>, vector<1x4x256xf32>,
    return
  }
  func.func @transform_0(%arg0: i32) -> (i32, i32) {
    %c0_i32 = arith.constant 0 : i32
    %c0_i32_0 = arith.constant 0 : i32
    %c0_i32_1 = arith.constant 0 : i32
    return %c0_i32, %c0_i32_0 : i32, i32
  }
  func.func @transform_1(%arg0: i32) -> (i32, i32, i32) {
    %c0_i32 = arith.constant 0 : i32
    %c0_i32_0 = arith.constant 0 : i32
    %c0_i32_1 = arith.constant 0 : i32
    return %arg0, %c0_i32, %c0_i32_0 : i32, i32, i32
  }
  func.func @transform_2(%arg0: i32) -> (i32, i32) {
    %c0_i32 = arith.constant 0 : i32
    %c0_i32_0 = arith.constant 0 : i32
    %c0_i32_1 = arith.constant 0 : i32
    return %c0_i32, %c0_i32_0 : i32, i32
  }
  func.func @transform_3(%arg0: i32) -> (i32, i32) {
    %c0_i32 = arith.constant 0 : i32
    %c0_i32_0 = arith.constant 0 : i32
    %c0_i32_1 = arith.constant 0 : i32
    return %c0_i32, %c0_i32_0 : i32, i32
  }
  func.func @transform_4(%arg0: i32) -> (i32, i32) {
    %c0_i32 = arith.constant 0 : i32
    %c0_i32_0 = arith.constant 0 : i32
    %c0_i32_1 = arith.constant 0 : i32
    return %c0_i32, %c0_i32_0 : i32, i32
  }
  func.func @transform_5(%arg0: i32) -> (i32, i32) {
    %c0_i32 = arith.constant 0 : i32
    %c0_i32_0 = arith.constant 0 : i32
    %c0_i32_1 = arith.constant 0 : i32
    return %c0_i32, %c0_i32_0 : i32, i32
  }
  func.func @transform_6(%arg0: i32) -> i32 {
    %c0_i32 = arith.constant 0 : i32
    %c0_i32_0 = arith.constant 0 : i32
    return %c0_i32 : i32
  }
  func.func @transform_7(%arg0: i32) -> (i32, i32, i32) {
    %c0_i32 = arith.constant 0 : i32
    %c0_i32_0 = arith.constant 0 : i32
    %c0_i32_1 = arith.constant 0 : i32
    return %arg0, %c0_i32, %c0_i32_0 : i32, i32, i32
  }
}

</mosaic_0001>

<llo_original>
// kernel: residual_block.1
$region0: #{residual_block.1}
  #allocation0 [shape = 'u32[]', space=smem, size = 0x4, offset = 0x4, fixed_abs, tag = 'smem constant byte address 0x4 - core index']
  #allocation1 [shape = 'u32[144,128]{1,0:T(1,128)}', space=vmem, size = 0x12000, scoped, tag = 'internal scratch']
  #allocation2 [shape = 'f32[1]{0:T(128)S(6)}', space=smem, size = 0x200, scoped, tag = 'scoped memory for residual_block.1']
  %s0 = inlined_call_operand.vmem [shape: s32[4,256], index: 0, kind: input, shape index: {}]
  %s1 = inlined_call_operand.vmem [shape: f32[2,4,256], index: 1, kind: input, shape index: {}]
  %s2 = inlined_call_operand.vmem [shape: f32[4,36], index: 2, kind: input, shape index: {}]
  %s3 = inlined_call_operand.vmem [shape: f32[4,1], index: 3, kind: input, shape index: {}]
  %s4 = inlined_call_operand.vmem [shape: f32[4,36], index: 4, kind: input, shape index: {}]
  %s5 = inlined_call_operand.vmem [shape: f32[4,1], index: 5, kind: input, shape index: {}]
  %s6 = inlined_call_operand.<no memory space> [shape: f32[1], index: 6, kind: input, shape index: {}]
  %s7 = inlined_call_operand.vmem [shape: f32[2,4,256], index: 7, kind: output, shape index: {}]
  %s8 = sld [smem:[#allocation0]]
  $region61: #{residual_block.1} parent=0
    _
  %s10 = ssub.s32 1, %s8
  %s11 = scalar_select 0, %s10, %s8
  %12 = sst [smem:[#allocation2]] %s6
  loop: start=0, step=1, limit=4
  $region2: #{residual_block.1} parent=0 // loop_pre_header
    _
  $region3: #{residual_block.1} parent=0 // loop_header
    %s14 = sphi 0, %s18
    %p15 = scmp.ge.s32.totalorder %s14, 4
    %s22 = sphi 0, %s22
    %s24 = sphi 0, %s22
    %s25 = sphi 0, %s24
    %s39 = sphi 0, %s25
    %s45 = sphi 0, %s47
    %s48 = sphi 0, %s45
    %s49 = sphi 0, %s48
    %s65 = sphi 0, %s49
    %s69 = sphi 0, %s69
    %s71 = sphi 0, %s69
    %s72 = sphi 0, %s71
    %s86 = sphi 0, %s72
    %s90 = sphi 0, %s90
    %s92 = sphi 0, %s90
    %s93 = sphi 0, %s92
    %s107 = sphi 0, %s93
    %s111 = sphi 0, %s111
    %s113 = sphi 0, %s111
    %s114 = sphi 0, %s113
    %s128 = sphi 0, %s114
    %s132 = sphi 0, %s132
    %s134 = sphi 0, %s132
    %s135 = sphi 0, %s134
    %s149 = sphi 0, %s135
    %s153 = sphi 0, %s153
    %s155 = sphi 0, %s153
    %s156 = sphi 0, %s155
    %s170 = sphi 0, %s156
    %s176 = sphi 0, %s178
    %s179 = sphi 0, %s176
    %s180 = sphi 0, %s179
    %s196 = sphi 0, %s180
  $region4: #{residual_block.1} parent=0 // loop_header_branch
    %17 = sbr.rel (%p15) target = $region8
  $region5: #{residual_block.1} parent=0 // loop_body
    %s19 = ssub.s32 %s14, 1
    %s20 = ssub.s32 %s14, 2
    %s21 = sadd.s32 %s14, 1
    %s23 = sadd.s32 %s22, 1
    %p26 = scmp.eq.s32.totalorder %s14, 1
    %p27 = scmp.ne.s32.totalorder %s22, %s24
    %p28 = scmp.eq.s32.totalorder %s14, 0
    %p29 = por %p27, %p28
    %p30 = scmp.ne.s32.totalorder %s22, %s24
    %p31 = scmp.eq.s32.totalorder %s19, 1
    %p32 = por %p30, %p31
    %p33 = scmp.ne.s32.totalorder %s24, %s25
    %p34 = scmp.eq.s32.totalorder %s19, 0
    %p35 = por %p33, %p34
    %p36 = scmp.ne.s32.totalorder %s24, %s25
    %p37 = scmp.eq.s32.totalorder %s20, 1
    %p38 = por %p36, %p37
    %p40 = scmp.ne.s32.totalorder %s25, %s39
    %p41 = scmp.eq.s32.totalorder %s20, 0
    %p42 = por %p40, %p41
    %s43 = ssub.s32 %s14, %s21
    %p44 = scmp.eq.s32.totalorder %s43, 0
    %s46 = sadd.s32 %s45, 1
    %s47 = scalar_select %p44, %s45, %s46
    %p50 = pneg %p44
    %p51 = scmp.eq.s32.totalorder %s14, 1
    %p52 = por %p50, %p51
    %p53 = scmp.ne.s32.totalorder %s45, %s48
    %p54 = scmp.eq.s32.totalorder %s14, 0
    %p55 = por %p53, %p54
    %p56 = scmp.ne.s32.totalorder %s45, %s48
    %p57 = scmp.eq.s32.totalorder %s19, 1
    %p58 = por %p56, %p57
    %p59 = scmp.ne.s32.totalorder %s48, %s49
    %p60 = scmp.eq.s32.totalorder %s19, 0
    %p61 = por %p59, %p60
    %p62 = scmp.ne.s32.totalorder %s48, %s49
    %p63 = scmp.eq.s32.totalorder %s20, 1
    %p64 = por %p62, %p63
    %p66 = scmp.ne.s32.totalorder %s49, %s65
    %p67 = scmp.eq.s32.totalorder %s20, 0
    %p68 = por %p66, %p67
    %s70 = sadd.s32 %s69, 1
    %p73 = scmp.eq.s32.totalorder %s14, 1
    %p74 = scmp.ne.s32.totalorder %s69, %s71
    %p75 = scmp.eq.s32.totalorder %s14, 0
    %p76 = por %p74, %p75
    %p77 = scmp.ne.s32.totalorder %s69, %s71
    %p78 = scmp.eq.s32.totalorder %s19, 1
    %p79 = por %p77, %p78
    %p80 = scmp.ne.s32.totalorder %s71, %s72
    %p81 = scmp.eq.s32.totalorder %s19, 0
    %p82 = por %p80, %p81
    %p83 = scmp.ne.s32.totalorder %s71, %s72
    %p84 = scmp.eq.s32.totalorder %s20, 1
    %p85 = por %p83, %p84
    %p87 = scmp.ne.s32.totalorder %s72, %s86
    %p88 = scmp.eq.s32.totalorder %s20, 0
    %p89 = por %p87, %p88
    %s91 = sadd.s32 %s90, 1
    %p94 = scmp.eq.s32.totalorder %s14, 1
    %p95 = scmp.ne.s32.totalorder %s90, %s92
    %p96 = scmp.eq.s32.totalorder %s14, 0
    %p97 = por %p95, %p96
    %p98 = scmp.ne.s32.totalorder %s90, %s92
    %p99 = scmp.eq.s32.totalorder %s19, 1
    %p100 = por %p98, %p99
    %p101 = scmp.ne.s32.totalorder %s92, %s93
    %p102 = scmp.eq.s32.totalorder %s19, 0
    %p103 = por %p101, %p102
    %p104 = scmp.ne.s32.totalorder %s92, %s93
    %p105 = scmp.eq.s32.totalorder %s20, 1
    %p106 = por %p104, %p105
    %p108 = scmp.ne.s32.totalorder %s93, %s107
    %p109 = scmp.eq.s32.totalorder %s20, 0
    %p110 = por %p108, %p109
    %s112 = sadd.s32 %s111, 1
    %p115 = scmp.eq.s32.totalorder %s14, 1
    %p116 = scmp.ne.s32.totalorder %s111, %s113
    %p117 = scmp.eq.s32.totalorder %s14, 0
    %p118 = por %p116, %p117
    %p119 = scmp.ne.s32.totalorder %s111, %s113
    %p120 = scmp.eq.s32.totalorder %s19, 1
    %p121 = por %p119, %p120
    %p122 = scmp.ne.s32.totalorder %s113, %s114
    %p123 = scmp.eq.s32.totalorder %s19, 0
    %p124 = por %p122, %p123
    %p125 = scmp.ne.s32.totalorder %s113, %s114
    %p126 = scmp.eq.s32.totalorder %s20, 1
    %p127 = por %p125, %p126
    %p129 = scmp.ne.s32.totalorder %s114, %s128
    %p130 = scmp.eq.s32.totalorder %s20, 0
    %p131 = por %p129, %p130
    %s133 = sadd.s32 %s132, 1
    %p136 = scmp.eq.s32.totalorder %s14, 1
    %p137 = scmp.ne.s32.totalorder %s132, %s134
    %p138 = scmp.eq.s32.totalorder %s14, 0
    %p139 = por %p137, %p138
    %p140 = scmp.ne.s32.totalorder %s132, %s134
    %p141 = scmp.eq.s32.totalorder %s19, 1
    %p142 = por %p140, %p141
    %p143 = scmp.ne.s32.totalorder %s134, %s135
    %p144 = scmp.eq.s32.totalorder %s19, 0
    %p145 = por %p143, %p144
    %p146 = scmp.ne.s32.totalorder %s134, %s135
    %p147 = scmp.eq.s32.totalorder %s20, 1
    %p148 = por %p146, %p147
    %p150 = scmp.ne.s32.totalorder %s135, %s149
    %p151 = scmp.eq.s32.totalorder %s20, 0
    %p152 = por %p150, %p151
    %s154 = sadd.s32 %s153, 1
    %p157 = scmp.eq.s32.totalorder %s14, 1
    %p158 = scmp.ne.s32.totalorder %s153, %s155
    %p159 = scmp.eq.s32.totalorder %s14, 0
    %p160 = por %p158, %p159
    %p161 = scmp.ne.s32.totalorder %s153, %s155
    %p162 = scmp.eq.s32.totalorder %s19, 1
    %p163 = por %p161, %p162
    %p164 = scmp.ne.s32.totalorder %s155, %s156
    %p165 = scmp.eq.s32.totalorder %s19, 0
    %p166 = por %p164, %p165
    %p167 = scmp.ne.s32.totalorder %s155, %s156
    %p168 = scmp.eq.s32.totalorder %s20, 1
    %p169 = por %p167, %p168
    %p171 = scmp.ne.s32.totalorder %s156, %s170
    %p172 = scmp.eq.s32.totalorder %s20, 0
    %p173 = por %p171, %p172
    %s174 = ssub.s32 %s14, %s21
    %p175 = scmp.eq.s32.totalorder %s174, 0
    %s177 = sadd.s32 %s176, 1
    %s178 = scalar_select %p175, %s176, %s177
    %p181 = pneg %p175
    %p182 = scmp.eq.s32.totalorder %s14, 1
    %p183 = por %p181, %p182
    %p184 = scmp.ne.s32.totalorder %s176, %s179
    %p185 = scmp.eq.s32.totalorder %s14, 0
    %p186 = por %p184, %p185
    %p187 = scmp.ne.s32.totalorder %s176, %s179
    %p188 = scmp.eq.s32.totalorder %s19, 1
    %p189 = por %p187, %p188
    %p190 = scmp.ne.s32.totalorder %s179, %s180
    %p191 = scmp.eq.s32.totalorder %s19, 0
    %p192 = por %p190, %p191
    %p193 = scmp.ne.s32.totalorder %s179, %s180
    %p194 = scmp.eq.s32.totalorder %s20, 1
    %p195 = por %p193, %p194
    %p197 = scmp.ne.s32.totalorder %s180, %s196
    %p198 = scmp.eq.s32.totalorder %s20, 0
    %p199 = por %p197, %p198
    %p200 = scmp.le.s32.totalorder 1, %s14
    %p201 = scmp.lt.s32.totalorder %s14, 3
    %p202 = pnand %p200, %p201
    %p203 = pneg %p202
    // Predicated region
    $region9: #{residual_block.1} parent=5 // pred_check
      _
    $region10: #{residual_block.1} parent=5 // pred_check_branch
      %205 = sbr.rel (%p202) target = $region12
    $region11: #{residual_block.1} parent=5 // pred_region
      %s206 = ssub.s32 %s14, 1
      // Predicated region
      $region13: #{residual_block.1} parent=11 // pred_check
        %p207 = pneg %p35
      $region14: #{residual_block.1} parent=11 // pred_check_branch
        %209 = sbr.rel (%p207) target = $region16
      $region15: #{residual_block.1} parent=11 // pred_region
        _
      $region16: #{residual_block.1} parent=11 // pred_fallthru
        _
      // Predicated region
      $region17: #{residual_block.1} parent=11 // pred_check
        %p210 = pneg %p82
      $region18: #{residual_block.1} parent=11 // pred_check_branch
        %212 = sbr.rel (%p210) target = $region20
      $region19: #{residual_block.1} parent=11 // pred_region
        _
      $region20: #{residual_block.1} parent=11 // pred_fallthru
        _
      // Predicated region
      $region21: #{residual_block.1} parent=11 // pred_check
        %p213 = pneg %p103
      $region22: #{residual_block.1} parent=11 // pred_check_branch
        %215 = sbr.rel (%p213) target = $region24
      $region23: #{residual_block.1} parent=11 // pred_region
        _
      $region24: #{residual_block.1} parent=11 // pred_fallthru
        _
      // Predicated region
      $region25: #{residual_block.1} parent=11 // pred_check
        %p216 = pneg %p124
      $region26: #{residual_block.1} parent=11 // pred_check_branch
        %218 = sbr.rel (%p216) target = $region28
      $region27: #{residual_block.1} parent=11 // pred_region
        _
      $region28: #{residual_block.1} parent=11 // pred_fallthru
        _
      // Predicated region
      $region29: #{residual_block.1} parent=11 // pred_check
        %p219 = pneg %p145
      $region30: #{residual_block.1} parent=11 // pred_check_branch
        %221 = sbr.rel (%p219) target = $region32
      $region31: #{residual_block.1} parent=11 // pred_region
        _
      $region32: #{residual_block.1} parent=11 // pred_fallthru
        _
      // Predicated region
      $region33: #{residual_block.1} parent=11 // pred_check
        %p222 = pneg %p166
      $region34: #{residual_block.1} parent=11 // pred_check_branch
        %224 = sbr.rel (%p222) target = $region36
      $region35: #{residual_block.1} parent=11 // pred_region
        _
      $region36: #{residual_block.1} parent=11 // pred_fallthru
        _
    $region12: #{residual_block.1} parent=5 // pred_fallthru
      _
    %p225 = scmp.lt.s32.totalorder %s14, 2
    // Predicated region
    $region37: #{residual_block.1} parent=5 // pred_check
      %p226 = pneg %p225
    $region38: #{residual_block.1} parent=5 // pred_check_branch
      %228 = sbr.rel (%p226) target = $region40
    $region39: #{residual_block.1} parent=5 // pred_region
      // Predicated region
      $region41: #{residual_block.1} parent=39 // pred_check
        %p229 = pneg %p55
      $region42: #{residual_block.1} parent=39 // pred_check_branch
        %231 = sbr.rel (%p229) target = $region44
      $region43: #{residual_block.1} parent=39 // pred_region
        %p232 = scmp.lt.s32.totalorder %s14, 1
        %s233 = scalar_select %p232, %s14, 1
        %s234 = smul.addr %s233, 2
        %s235 = smul.addr %s234, 4
        %s236 = scalar_lea.vmem %s1, %s235
      $region44: #{residual_block.1} parent=39 // pred_fallthru
        _
    $region40: #{residual_block.1} parent=5 // pred_fallthru
      _
    %p237 = scmp.le.s32.totalorder 1, %s14
    %p238 = scmp.lt.s32.totalorder %s14, 3
    %p239 = pnand %p237, %p238
    %p240 = pneg %p239
    // Predicated region
    $region45: #{residual_block.1} parent=5 // pred_check
      _
    $region46: #{residual_block.1} parent=5 // pred_check_branch
      %242 = sbr.rel (%p239) target = $region48
    $region47: #{residual_block.1} parent=5 // pred_region
      %s243 = ssub.s32 %s14, 1
      %p244 = pneg %p35
      %p245 = pneg %p32
      %p246 = scmp.lt.s32.totalorder %s19, 1
      %s247 = scalar_select %p246, %s19, 1
      %s248 = smul.addr %s247, 2
      %s249 = smul.addr %s248, 4
      %s250 = scalar_lea.vmem %s1, %s249
      %p251 = pneg %p61
      %p252 = pneg %p58
      %p253 = pneg %p82
      %p254 = pneg %p79
      %p255 = pneg %p103
      %p256 = pneg %p100
      %p257 = pneg %p124
      %p258 = pneg %p121
      %p259 = pneg %p145
      %p260 = pneg %p142
      %p261 = pneg %p166
      %p262 = pneg %p163
      %p263 = pneg %p192
      %p264 = pneg %p189
      %p265 = scmp.lt.s32.totalorder %s19, 1
      %s266 = scalar_select %p265, %s19, 1
      %s267 = smul.addr %s266, 2
      %s268 = smul.addr %s267, 4
      %s269 = scalar_lea.vmem %s7, %s268
      %p270 = scmp.lt.s32.totalorder %s19, 1
      %s271 = scalar_select %p270, %s19, 1
      %s272 = smul.addr %s271, 2
      %s273 = smul.addr %s272, 4
      %s274 = scalar_lea.vmem %s1, %s273
      %p275 = scmp.lt.s32.totalorder %s19, 1
      %s276 = scalar_select %p275, %s19, 1
      %s277 = smul.addr %s276, 2
      %s278 = smul.addr %s277, 4
      %s279 = scalar_lea.vmem %s7, %s278
      %v280 = vld [vmem:[%s274] sm:$0xff]
      %v281 = vld [vmem:[%s0] sm:$0xff]
      %vm282 = vcmp.ne.s32.totalorder %v281, 0
      %v283 = vsel %vm282, 1, 0
      %v284 = vlaneseq
      %v285 = vshrl.u32 %v284, 7
      %v286 = vsub.s32 0, %v285
      %v287 = vrot.slane %v283, %v286
      %v288 = vlaneseq
      %v289 = vshrl.u32 %v288, 7
      %v290 = vsub.s32 4, %v289
      %v291 = vrot.slane %v283, %v290
      %v292 = vlaneseq
      %v293 = vshrl.u32 %v292, 7
      %v294 = vsub.s32 0, %v293
      %v295 = vrot.slane %v287, %v294
      %v296 = vlaneseq
      %v297 = vshrl.u32 %v296, 7
      %v298 = vsub.s32 0, %v297
      %v299 = vrot.slane %v291, %v298
      %vm300 = vcmp.eq.s32.totalorder %v295, 1
      %vm301 = vcmp.eq.s32.totalorder %v299, 1
      %v302 = vlaneseq
      %v303 = vshrl.u32 %v302, 7
      %v304 = vsub.s32 1, %v303
      %v305 = vrot.slane %v283, %v304
      %v306 = vlaneseq
      %v307 = vshrl.u32 %v306, 7
      %v308 = vsub.s32 5, %v307
      %v309 = vrot.slane %v283, %v308
      %v310 = vlaneseq
      %v311 = vshrl.u32 %v310, 7
      %v312 = vsub.s32 1, %v311
      %v313 = vrot.slane %v305, %v312
      %v314 = vlaneseq
      %v315 = vshrl.u32 %v314, 7
      %v316 = vsub.s32 1, %v315
      %v317 = vrot.slane %v309, %v316
      %vm318 = vcmp.eq.s32.totalorder %v313, 1
      %vm319 = vcmp.eq.s32.totalorder %v317, 1
      %v320 = vlaneseq
      %v321 = vshrl.u32 %v320, 7
      %v322 = vsub.s32 2, %v321
      %v323 = vrot.slane %v283, %v322
      %v324 = vlaneseq
      %v325 = vshrl.u32 %v324, 7
      %v326 = vsub.s32 6, %v325
      %v327 = vrot.slane %v283, %v326
      %v328 = vlaneseq
      %v329 = vshrl.u32 %v328, 7
      %v330 = vsub.s32 2, %v329
      %v331 = vrot.slane %v323, %v330
      %v332 = vlaneseq
      %v333 = vshrl.u32 %v332, 7
      %v334 = vsub.s32 2, %v333
      %v335 = vrot.slane %v327, %v334
      %vm336 = vcmp.eq.s32.totalorder %v331, 1
      %vm337 = vcmp.eq.s32.totalorder %v335, 1
      %v338 = vlaneseq
      %v339 = vshrl.u32 %v338, 7
      %v340 = vsub.s32 3, %v339
      %v341 = vrot.slane %v283, %v340
      %v342 = vlaneseq
      %v343 = vshrl.u32 %v342, 7
      %v344 = vsub.s32 7, %v343
      %v345 = vrot.slane %v283, %v344
      %v346 = vlaneseq
      %v347 = vshrl.u32 %v346, 7
      %v348 = vsub.s32 3, %v347
      %v349 = vrot.slane %v341, %v348
      %v350 = vlaneseq
      %v351 = vshrl.u32 %v350, 7
      %v352 = vsub.s32 3, %v351
      %v353 = vrot.slane %v345, %v352
      %vm354 = vcmp.eq.s32.totalorder %v349, 1
      %vm355 = vcmp.eq.s32.totalorder %v353, 1
      %s356 = sld [smem:[#allocation2]]
      %v358 = vcombine.high %v280, %v280
      %359 = vrot.lane.b32.xlu0 %v358, 1
      %v360 = vpop.permute.xlu0 %359
      %362 = vrot.lane.b32.xlu0 %v280, 1
      %v363 = vpop.permute.xlu0 %362
      %vm364 = vcmask 7168
      %v365 = vsel %vm364, %v363, %v360
      %v368 = vsel %vm364, %v360, %v363
      %369 = vrot.lane.b32.xlu0 %v280, 127
      %v370 = vpop.permute.xlu0 %369
      %371 = vrot.lane.b32.xlu0 %v358, 127
      %v372 = vpop.permute.xlu0 %371
      %vm373 = vcmask 1039360
      %v374 = vsel %vm373, %v370, %v372
      %v378 = vsel %vm373, %v372, %v370
      %v379 = vsel %vm300, %v374, %v368
      %v380 = vsel %vm301, %v378, %v365
      %v381 = vsel %vm318, %v368, %v374
      %v382 = vsel %vm319, %v365, %v378
      %384 = vrot.lane.b32.xlu0 %v380, 16
      %v385 = vpop.permute.xlu0 %384
      %388 = vrot.lane.b32.xlu0 %v379, 16
      %v389 = vpop.permute.xlu0 %388
      %vm390 = vcmask 130048
      %v391 = vsel %vm390, %v389, %v385
      %v394 = vsel %vm390, %v385, %v389
      %395 = vrot.lane.b32.xlu0 %v379, 112
      %v396 = vpop.permute.xlu0 %395
      %397 = vrot.lane.b32.xlu0 %v380, 112
      %v398 = vpop.permute.xlu0 %397
      %vm399 = vcmask 916480
      %v400 = vsel %vm399, %v396, %v398
      %v404 = vsel %vm399, %v398, %v396
      %v405 = vsel %vm336, %v400, %v394
      %v406 = vsel %vm337, %v404, %v391
      %v407 = vsel %vm354, %v394, %v400
      %v408 = vsel %vm355, %v391, %v404
      %409 = vrot.lane.b32.xlu0 %v358, 16
      %v410 = vpop.permute.xlu0 %409
      %412 = vrot.lane.b32.xlu0 %v280, 16
      %v413 = vpop.permute.xlu0 %412
      %v414 = vsel %vm390, %v413, %v410
      %v417 = vsel %vm390, %v410, %v413
      %418 = vrot.lane.b32.xlu0 %v280, 112
      %v419 = vpop.permute.xlu0 %418
      %420 = vrot.lane.b32.xlu0 %v358, 112
      %v421 = vpop.permute.xlu0 %420
      %v422 = vsel %vm399, %v419, %v421
      %v426 = vsel %vm399, %v421, %v419
      %v427 = vsel %vm336, %v422, %v417
      %v428 = vsel %vm337, %v426, %v414
      %v429 = vsel %vm354, %v417, %v422
      %v430 = vsel %vm355, %v414, %v426
      %432 = vrot.lane.b32.xlu0 %v382, 16
      %v433 = vpop.permute.xlu0 %432
      %436 = vrot.lane.b32.xlu0 %v381, 16
      %v437 = vpop.permute.xlu0 %436
      %v438 = vsel %vm390, %v437, %v433
      %v441 = vsel %vm390, %v433, %v437
      %442 = vrot.lane.b32.xlu0 %v381, 112
      %v443 = vpop.permute.xlu0 %442
      %444 = vrot.lane.b32.xlu0 %v382, 112
      %v445 = vpop.permute.xlu0 %444
      %v446 = vsel %vm399, %v443, %v445
      %v450 = vsel %vm399, %v445, %v443
      %v451 = vsel %vm336, %v446, %v441
      %v452 = vsel %vm337, %v450, %v438
      %v453 = vsel %vm354, %v441, %v446
      %v454 = vsel %vm355, %v438, %v450
      %v457 = vrot.slane %v427, 4
      %v458 = vrot.slane %v428, 4
      %v461 = vrot.slane %v379, 4
      %v462 = vrot.slane %v380, 4
      %v466 = vrot.slane %v381, 4
      %v467 = vrot.slane %v382, 4
      %v472 = vrot.slane %v429, 4
      %v473 = vrot.slane %v430, 4
      %vm476 = vcmask 1043456
      %v477 = vsel %vm476, %v405, %v457
      %v478 = vsel %vm476, %v406, %v458
      %v479 = vsel %vm476, %v451, %v461
      %v480 = vsel %vm476, %v452, %v462
      %v481 = vsel %vm476, %v280, %v466
      %v482 = vsel %vm476, %v358, %v467
      %v483 = vsel %vm476, %v407, %v472
      %v484 = vsel %vm476, %v408, %v473
      %v485 = vld [vmem:[%s2] sm:$0xf]
      %v486 = vld [vmem:[%s3] sm:$0xf]
      %488 = vset.pattern.permute.xlu0 0
      %489 = vperm.xlu0 %488, %v486
      %v490 = vpop.permute.xlu0 %489
      %vm492 = vcmask 293888
      %v494 = vsel %vm492, %v485, 0
      %v497 = vsel %vm476, %v453, 0
      %v500 = vsel %vm476, %v454, 0
      %502 = vmatprep.subr.mxu0 %v478
      %503 = vmatpush1.msra.mxu0 %v477
      %504 = vmatprep.subr.mxu0 %v480
      %505 = vmatpush1.msra.mxu0 %v479
      %506 = vmatprep.subr.mxu0 %v482
      %507 = vmatpush1.msra.mxu0 %v481
      %508 = vmatprep.subr.mxu0 %v484
      %509 = vmatpush1.msra.mxu0 %v483
      %510 = vmatprep.subr.mxu0 %v500
      %511 = vmatpush1.msra.mxu0 %v497
      %512 = vmatprep.subr.mxu0 0.0
      %513 = vmatpush1.msra.mxu0 0.0
      %514 = vmatprep.subr.mxu0 0.0
      %515 = vmatpush1.msra.mxu0 0.0
      %516 = vmatprep.subr.mxu0 0.0
      %517 = vmatpush1.msra.mxu0 0.0
      %518 = vmatprep.subr.mxu0 0.0
      %519 = vmatpush1.msra.mxu0 0.0
      %520 = vmatprep.subr.mxu0 0.0
      %521 = vmatpush1.msra.mxu0 0.0
      %522 = vmatprep.subr.mxu0 0.0
      %523 = vmatpush1.msra.mxu0 0.0
      %524 = vmatprep.subr.mxu0 0.0
      %525 = vmatpush1.msra.mxu0 0.0
      %526 = vmatprep.subr.mxu0 0.0
      %527 = vmatpush1.msra.mxu0 0.0
      %528 = vmatprep.subr.mxu0 0.0
      %529 = vmatpush1.msra.mxu0 0.0
      %530 = vmatprep.subr.mxu0 0.0
      %531 = vmatpush1.msra.mxu0 0.0
      %532 = vmatprep.subr.mxu0 0.0
      %533 = vmatpush1.msra.mxu0 0.0
      %534 = vmatprep.subr.mxu0 0.0
      %535 = vmatpush1.msra.mxu0 0.0
      %536 = vmatprep.subr.mxu0 0.0
      %537 = vmatpush1.msra.mxu0 0.0
      %538 = vmatprep.subr.mxu0 0.0
      %539 = vmatpush1.msra.mxu0 0.0
      %540 = vmatprep.subr.mxu0 0.0
      %541 = vmatpush1.msra.mxu0 0.0
      %542 = vmatprep.subr.mxu0 0.0
      %543 = vmatpush1.msra.mxu0 0.0
      %544 = vmatprep.subr.mxu0 0.0
      %545 = vmatpush1.msra.mxu0 0.0
      %546 = vmatprep.subr.mxu0 0.0
      %547 = vmatpush1.msra.mxu0 0.0
      %548 = vmatprep.subr.mxu0 0.0
      %549 = vmatpush1.msra.mxu0 0.0
      %550 = vmatprep.subr.mxu0 0.0
      %551 = vmatpush1.msra.mxu0 0.0
      %552 = vmatprep.subr.mxu0 0.0
      %553 = vmatpush1.msra.mxu0 0.0
      %554 = vmatprep.subr.mxu0 0.0
      %555 = vmatpush1.msra.mxu0 0.0
      %556 = vmatprep.subr.mxu0 0.0
      %557 = vmatpush1.msra.mxu0 0.0
      %558 = vmatprep.subr.mxu0 0.0
      %559 = vmatpush1.msra.mxu0 0.0
      %560 = vmatprep.subr.mxu0 0.0
      %561 = vmatpush1.msra.mxu0 0.0
      %562 = vmatprep.subr.mxu0 0.0
      %563 = vmatpush1.msra.mxu0 0.0
      %564 = vmatprep.subr.mxu0 0.0
      %565 = vmatpush1.msra.mxu0 0.0
      %566 = vmatprep.mubr.f32.mxu0 0.0
      %567 = vmatmul.mubr.f32.gmra.mrb[0].mxu0 %v494
      %v568 = vpop.f32.mrb[0].mxu0
      %v569 = vadd.f32 %v490, %v568
      %v570 = vpop.f32.mrb[0].mxu0
      %v571 = vadd.f32 %v490, %v570
      %572 = vdwg.mxu0
      %vm573 = vcmp.gt.f32.partialorder %v569, 0.0
      %vm574 = vcmp.gt.f32.partialorder %v571, 0.0
      %v575 = vstv %s356
      %v576 = vmul.f32 %v575, %v569
      %v577 = vmul.f32 %v575, %v571
      %v578 = vsel %vm573, %v569, %v576
      %v579 = vsel %vm574, %v571, %v577
      %581 = vrot.lane.b32.xlu0 %v579, 1
      %v582 = vpop.permute.xlu0 %581
      %585 = vrot.lane.b32.xlu0 %v578, 1
      %v586 = vpop.permute.xlu0 %585
      %v587 = vsel %vm364, %v586, %v582
      %v590 = vsel %vm364, %v582, %v586
      %591 = vrot.lane.b32.xlu0 %v578, 127
      %v592 = vpop.permute.xlu0 %591
      %593 = vrot.lane.b32.xlu0 %v579, 127
      %v594 = vpop.permute.xlu0 %593
      %v595 = vsel %vm373, %v592, %v594
      %v599 = vsel %vm373, %v594, %v592
      %v600 = vsel %vm300, %v595, %v590
      %v601 = vsel %vm301, %v599, %v587
      %v602 = vsel %vm318, %v590, %v595
      %v603 = vsel %vm319, %v587, %v599
      %605 = vrot.lane.b32.xlu0 %v601, 16
      %v606 = vpop.permute.xlu0 %605
      %609 = vrot.lane.b32.xlu0 %v600, 16
      %v610 = vpop.permute.xlu0 %609
      %v611 = vsel %vm390, %v610, %v606
      %v614 = vsel %vm390, %v606, %v610
      %615 = vrot.lane.b32.xlu0 %v600, 112
      %v616 = vpop.permute.xlu0 %615
      %617 = vrot.lane.b32.xlu0 %v601, 112
      %v618 = vpop.permute.xlu0 %617
      %v619 = vsel %vm399, %v616, %v618
      %v623 = vsel %vm399, %v618, %v616
      %v624 = vsel %vm336, %v619, %v614
      %v625 = vsel %vm337, %v623, %v611
      %v626 = vsel %vm354, %v614, %v619
      %v627 = vsel %vm355, %v611, %v623
      %628 = vrot.lane.b32.xlu0 %v579, 16
      %v629 = vpop.permute.xlu0 %628
      %631 = vrot.lane.b32.xlu0 %v578, 16
      %v632 = vpop.permute.xlu0 %631
      %v633 = vsel %vm390, %v632, %v629
      %v636 = vsel %vm390, %v629, %v632
      %637 = vrot.lane.b32.xlu0 %v578, 112
      %v638 = vpop.permute.xlu0 %637
      %639 = vrot.lane.b32.xlu0 %v579, 112
      %v640 = vpop.permute.xlu0 %639
      %v641 = vsel %vm399, %v638, %v640
      %v645 = vsel %vm399, %v640, %v638
      %v646 = vsel %vm336, %v641, %v636
      %v647 = vsel %vm337, %v645, %v633
      %v648 = vsel %vm354, %v636, %v641
      %v649 = vsel %vm355, %v633, %v645
      %651 = vrot.lane.b32.xlu0 %v603, 16
      %v652 = vpop.permute.xlu0 %651
      %655 = vrot.lane.b32.xlu0 %v602, 16
      %v656 = vpop.permute.xlu0 %655
      %v657 = vsel %vm390, %v656, %v652
      %v660 = vsel %vm390, %v652, %v656
      %661 = vrot.lane.b32.xlu0 %v602, 112
      %v662 = vpop.permute.xlu0 %661
      %663 = vrot.lane.b32.xlu0 %v603, 112
      %v664 = vpop.permute.xlu0 %663
      %v665 = vsel %vm399, %v662, %v664
      %v669 = vsel %vm399, %v664, %v662
      %v670 = vsel %vm336, %v665, %v660
      %v671 = vsel %vm337, %v669, %v657
      %v672 = vsel %vm354, %v660, %v665
      %v673 = vsel %vm355, %v657, %v669
      %v676 = vrot.slane %v646, 4
      %v677 = vrot.slane %v647, 4
      %v680 = vrot.slane %v600, 4
      %v681 = vrot.slane %v601, 4
      %v684 = vrot.slane %v602, 4
      %v685 = vrot.slane %v603, 4
      %v690 = vrot.slane %v648, 4
      %v691 = vrot.slane %v649, 4
      %v694 = vsel %vm476, %v624, %v676
      %v695 = vsel %vm476, %v625, %v677
      %v696 = vsel %vm476, %v670, %v680
      %v697 = vsel %vm476, %v671, %v681
      %v698 = vsel %vm476, %v578, %v684
      %v699 = vsel %vm476, %v579, %v685
      %v700 = vsel %vm476, %v626, %v690
      %v701 = vsel %vm476, %v627, %v691
      %v702 = vld [vmem:[%s4] sm:$0xf]
      %v703 = vld [vmem:[%s5] sm:$0xf]
      %705 = vset.pattern.permute.xlu0 0
      %706 = vperm.xlu0 %705, %v703
      %v707 = vpop.permute.xlu0 %706
      %v710 = vsel %vm492, %v702, 0
      %v713 = vsel %vm476, %v672, 0
      %v716 = vsel %vm476, %v673, 0
      %718 = vmatprep.subr.mxu0 %v695
      %719 = vmatpush1.msra.mxu0 %v694
      %720 = vmatprep.subr.mxu0 %v697
      %721 = vmatpush1.msra.mxu0 %v696
      %722 = vmatprep.subr.mxu0 %v699
      %723 = vmatpush1.msra.mxu0 %v698
      %724 = vmatprep.subr.mxu0 %v701
      %725 = vmatpush1.msra.mxu0 %v700
      %726 = vmatprep.subr.mxu0 %v716
      %727 = vmatpush1.msra.mxu0 %v713
      %728 = vmatprep.subr.mxu0 0.0
      %729 = vmatpush1.msra.mxu0 0.0
      %730 = vmatprep.subr.mxu0 0.0
      %731 = vmatpush1.msra.mxu0 0.0
      %732 = vmatprep.subr.mxu0 0.0
      %733 = vmatpush1.msra.mxu0 0.0
      %734 = vmatprep.subr.mxu0 0.0
      %735 = vmatpush1.msra.mxu0 0.0
      %736 = vmatprep.subr.mxu0 0.0
      %737 = vmatpush1.msra.mxu0 0.0
      %738 = vmatprep.subr.mxu0 0.0
      %739 = vmatpush1.msra.mxu0 0.0
      %740 = vmatprep.subr.mxu0 0.0
      %741 = vmatpush1.msra.mxu0 0.0
      %742 = vmatprep.subr.mxu0 0.0
      %743 = vmatpush1.msra.mxu0 0.0
      %744 = vmatprep.subr.mxu0 0.0
      %745 = vmatpush1.msra.mxu0 0.0
      %746 = vmatprep.subr.mxu0 0.0
      %747 = vmatpush1.msra.mxu0 0.0
      %748 = vmatprep.subr.mxu0 0.0
      %749 = vmatpush1.msra.mxu0 0.0
      %750 = vmatprep.subr.mxu0 0.0
      %751 = vmatpush1.msra.mxu0 0.0
      %752 = vmatprep.subr.mxu0 0.0
      %753 = vmatpush1.msra.mxu0 0.0
      %754 = vmatprep.subr.mxu0 0.0
      %755 = vmatpush1.msra.mxu0 0.0
      %756 = vmatprep.subr.mxu0 0.0
      %757 = vmatpush1.msra.mxu0 0.0
      %758 = vmatprep.subr.mxu0 0.0
      %759 = vmatpush1.msra.mxu0 0.0
      %760 = vmatprep.subr.mxu0 0.0
      %761 = vmatpush1.msra.mxu0 0.0
      %762 = vmatprep.subr.mxu0 0.0
      %763 = vmatpush1.msra.mxu0 0.0
      %764 = vmatprep.subr.mxu0 0.0
      %765 = vmatpush1.msra.mxu0 0.0
      %766 = vmatprep.subr.mxu0 0.0
      %767 = vmatpush1.msra.mxu0 0.0
      %768 = vmatprep.subr.mxu0 0.0
      %769 = vmatpush1.msra.mxu0 0.0
      %770 = vmatprep.subr.mxu0 0.0
      %771 = vmatpush1.msra.mxu0 0.0
      %772 = vmatprep.subr.mxu0 0.0
      %773 = vmatpush1.msra.mxu0 0.0
      %774 = vmatprep.subr.mxu0 0.0
      %775 = vmatpush1.msra.mxu0 0.0
      %776 = vmatprep.subr.mxu0 0.0
      %777 = vmatpush1.msra.mxu0 0.0
      %778 = vmatprep.subr.mxu0 0.0
      %779 = vmatpush1.msra.mxu0 0.0
      %780 = vmatprep.subr.mxu0 0.0
      %781 = vmatpush1.msra.mxu0 0.0
      %782 = vmatprep.mubr.f32.mxu0 0.0
      %783 = vmatmul.mubr.f32.gmra.mrb[0].mxu0 %v710
      %v784 = vpop.f32.mrb[0].mxu0
      %v785 = vadd.f32 %v707, %v784
      %v786 = vpop.f32.mrb[0].mxu0
      %v787 = vadd.f32 %v707, %v786
      %788 = vdwg.mxu0
      %v789 = vmul.f32 %v785, 0.1
      %v790 = vmul.f32 %v787, 0.1
      %v791 = vadd.f32 %v789, %v280
      %v792 = vadd.f32 %v790, %v358
      %v795 = vcombine.low %v791, %v792
      %797 = vst [vmem:[%s279] sm:$0xff] %v795
      %p798 = scmp.lt.s32.totalorder %s19, 1
      %s799 = scalar_select %p798, %s19, 1
      %s800 = smul.addr %s799, 2
      %s801 = smul.addr %s800, 4
      %s802 = scalar_lea.vmem %s7, %s801
      // Predicated region
      $region49: #{residual_block.1} parent=47 // pred_check
        %p803 = pneg %p189
      $region50: #{residual_block.1} parent=47 // pred_check_branch
        %805 = sbr.rel (%p803) target = $region52
      $region51: #{residual_block.1} parent=47 // pred_region
        _
      $region52: #{residual_block.1} parent=47 // pred_fallthru
        _
    $region48: #{residual_block.1} parent=5 // pred_fallthru
      _
    %p806 = scmp.le.s32.totalorder 2, %s14
    // Predicated region
    $region53: #{residual_block.1} parent=5 // pred_check
      %p807 = pneg %p806
    $region54: #{residual_block.1} parent=5 // pred_check_branch
      %809 = sbr.rel (%p807) target = $region56
    $region55: #{residual_block.1} parent=5 // pred_region
      %s810 = ssub.s32 %s14, 2
      // Predicated region
      $region57: #{residual_block.1} parent=55 // pred_check
        %p811 = pneg %p195
      $region58: #{residual_block.1} parent=55 // pred_check_branch
        %813 = sbr.rel (%p811) target = $region60
      $region59: #{residual_block.1} parent=55 // pred_region
        %p814 = scmp.lt.s32.totalorder %s20, 1
        %s815 = scalar_select %p814, %s20, 1
        %s816 = smul.addr %s815, 2
        %s817 = smul.addr %s816, 4
        %s818 = scalar_lea.vmem %s7, %s817
      $region60: #{residual_block.1} parent=55 // pred_fallthru
        _
    $region56: #{residual_block.1} parent=5 // pred_fallthru
      _
  $region6: #{residual_block.1} parent=0 // loop_footer
    %s18 = sadd.s32 1, %s14
  $region7: #{residual_block.1} parent=0 // loop_footer_branch
    %13 = sbr.rel target = $region3
  $region8: #{residual_block.1} parent=0 // loop_exit
    _

</llo_original>
